<compile_context>
chip_gen: v7x
topology: tpu7x:2x2x1
jax: 0.10.0
libtpu: 0.0.40
codegen_flags: <defaults>
</compile_context>

<pallas_src>
import functools

import jax
import jax.numpy as jnp
from jax.experimental import pallas as pl
from jax.experimental.pallas import tpu as pltpu


def mlp_kernel_t(xT_ref, w1_ref, b1_ref, w2_ref, b2_ref, w3_ref, b3_ref, oT_ref):
    """Fully lane-dense MLP: all operands are (features, batch_tile)."""
    xT = xT_ref[...]  # (n_in, TM), batch on lanes

    # fc1 + sigmoid (logistic routes through the EUP; VALU slots stay free)
    z1 = jnp.dot(w1_ref[...], xT, preferred_element_type=jnp.float32) + b1_ref[...]
    h1 = jax.nn.sigmoid(z1)

    # fc2 + relu
    z2 = jnp.dot(w2_ref[...], h1, preferred_element_type=jnp.float32) + b2_ref[...]
    h2 = jnp.maximum(z2, 0.0)

    # fc3 (no activation)
    z3 = jnp.dot(w3_ref[...], h2, preferred_element_type=jnp.float32) + b3_ref[...]
    oT_ref[...] = z3.astype(oT_ref.dtype)  # (n_out, TM): unmasked, lane-dense stores


def _round_up(x, m):
    return ((x + m - 1) // m) * m


def reference_forward(x, params):
    """Pure-JAX reference / small-batch path. x: (B, n_in); PyTorch-layout params."""
    w1, b1, w2, b2, w3, b3 = params
    h1 = jax.nn.sigmoid(x @ w1.T + b1[:, 0])
    h2 = jnp.maximum(h1 @ w2.T + b2[:, 0], 0.0)
    return h2 @ w3.T + b3[:, 0]


@functools.partial(jax.jit, static_argnames=("block_m",))
def net_forward(x, params, *, block_m=2048):
    """Batched forward pass.  x: (B, n_in) float32 -> (B, n_out) float32."""
    w1, b1, w2, b2, w3, b3 = params
    batch, n_in = x.shape
    n_mid_1 = w1.shape[0]
    n_mid_2 = w2.shape[0]
    n_out = w3.shape[0]

    # Tiny rollout batches: fixed pallas_call overhead dominates -> fused XLA path.
    if batch < 128:
        return reference_forward(x, params)

    # Lane-dense relayout: batch on the 128-lane axis, features on sublanes.
    xT = x.T  # (n_in, batch)

    # Batch tile: lane-aligned (multiple of 128), large to amortize per-step
    # overhead, and guaranteeing >= 2 grid steps so both v7x TensorCores work.
    if batch >= 256:
        tm = min(block_m, _round_up(pl.cdiv(batch, 2), 128))
    else:
        tm = _round_up(batch, 128)
    grid_m = pl.cdiv(batch, tm)  # ragged last block is masked by Pallas

    # x / out stream tile-by-tile along the batch (lane) axis; weights & biases
    # use constant index_maps so they stay VMEM-resident for the whole grid.
    x_spec = pl.BlockSpec((n_in, tm), lambda i: (0, i))
    o_spec = pl.BlockSpec((n_out, tm), lambda i: (0, i))
    w1_spec = pl.BlockSpec((n_mid_1, n_in), lambda i: (0, 0))
    b1_spec = pl.BlockSpec((n_mid_1, 1), lambda i: (0, 0))
    w2_spec = pl.BlockSpec((n_mid_2, n_mid_1), lambda i: (0, 0))
    b2_spec = pl.BlockSpec((n_mid_2, 1), lambda i: (0, 0))
    w3_spec = pl.BlockSpec((n_out, n_mid_2), lambda i: (0, 0))
    b3_spec = pl.BlockSpec((n_out, 1), lambda i: (0, 0))

    flops = 2 * batch * (n_in * n_mid_1 + n_mid_1 * n_mid_2 + n_mid_2 * n_out)
    weight_bytes = 4 * (
        n_mid_1 * n_in + n_mid_1 + n_mid_2 * n_mid_1 + n_mid_2 + n_out * n_mid_2 + n_out
    )
    cost = pl.CostEstimate(
        flops=flops,
        transcendentals=batch * n_mid_1,  # exp inside sigmoid
        bytes_accessed=batch * (n_in + n_out) * 4 + weight_bytes,
    )

    outT = pl.pallas_call(
        mlp_kernel_t,
        out_shape=jax.ShapeDtypeStruct((n_out, batch), jnp.float32),
        grid=(grid_m,),
        in_specs=[x_spec, w1_spec, b1_spec, w2_spec, b2_spec, w3_spec, b3_spec],
        out_specs=o_spec,
        compiler_params=pltpu.CompilerParams(
            # Batch tiles are independent; sharded across TensorCores where
            # the chip has more than one (v7x).
            dimension_semantics=("parallel",),
        ),
        cost_estimate=cost,
    )(xT, w1, b1, w2, b2, w3, b3)

    return outT.T  # back to PyTorch (batch, n_out) layout


def init_params(key, n_in, n_mid_1, n_mid_2, n_out):
    """Deterministic PyTorch-Linear-like init; w: (out, in), b: (out, 1)."""
    ks = jax.random.split(key, 6)

    def lin(kw, kb, fan_in, fan_out):
        bound = 1.0 / jnp.sqrt(jnp.float32(fan_in))
        w = jax.random.uniform(kw, (fan_out, fan_in), jnp.float32, -bound, bound)
        b = jax.random.uniform(kb, (fan_out, 1), jnp.float32, -bound, bound)
        return w, b

    w1, b1 = lin(ks[0], ks[1], n_in, n_mid_1)
    w2, b2 = lin(ks[2], ks[3], n_mid_1, n_mid_2)
    w3, b3 = lin(ks[4], ks[5], n_mid_2, n_out)
    return (w1, b1, w2, b2, w3, b3)


if __name__ == "__main__":
    # LunarLander-v2: obs dim 8, action dim 4; small hidden sizes.
    n_in, n_mid_1, n_mid_2, n_out = 8, 32, 32, 4

    key = jax.random.PRNGKey(0)
    k_x1, k_x2, k_p = jax.random.split(key, 3)
    params = init_params(k_p, n_in, n_mid_1, n_mid_2, n_out)

    # Ragged "training" batch: exercises the Pallas path with a 2-step grid
    # and a masked boundary block (no wrapper-side pad / slice).
    x_big = jax.random.normal(k_x1, (300, n_in), jnp.float32)
    out_big = jax.block_until_ready(net_forward(x_big, params))
    ref_big = reference_forward(x_big, params)
    assert out_big.shape == (300, n_out)
    assert jnp.allclose(out_big, ref_big, atol=2e-5, rtol=2e-5), "mismatch (batch=300)"

    # Tiny rollout batch: takes the pure-JAX fallback (kernel overhead not worth it).
    x_small = jax.random.normal(k_x2, (8, n_in), jnp.float32)
    out_small = jax.block_until_ready(net_forward(x_small, params))
    ref_small = reference_forward(x_small, params)
    assert out_small.shape == (8, n_out)
    assert jnp.allclose(out_small, ref_small, atol=2e-5, rtol=2e-5), "mismatch (batch=8)"

    print("KERNEL_OK")
</pallas_src>

<mosaic_0001>
module attributes {stable_mosaic.version = 11 : i64} {
  func.func @mlp_kernel_t(%arg0: i32, %arg1: memref<8x256xf32, #tpu.memory_space<vmem>>, %arg2: memref<32x8xf32, #tpu.memory_space<vmem>>, %arg3: memref<32x1xf32, #tpu.memory_space<vmem>>, %arg4: memref<32x32xf32, #tpu.memory_space<vmem>>, %arg5: memref<32x1xf32, #tpu.memory_space<vmem>>, %arg6: memref<4x32xf32, #tpu.memory_space<vmem>>, %arg7: memref<4x1xf32, #tpu.memory_space<vmem>>, %arg8: memref<4x256xf32, #tpu.memory_space<vmem>>) attributes {dimension_semantics = [#tpu.dimension_semantics<parallel>], iteration_bounds = array<i64: 2>, scalar_prefetch = 0 : i64, scratch_operands = 0 : i64, tpu.core_type = #tpu.core_type<tc>, window_params = [{transform_indices = @transform_0, window_bounds = array<i64: 8, 256>}, {pipeline_mode = #tpu.pipeline_mode<synchronous>, transform_indices = @transform_1, window_bounds = array<i64: 32, 8>}, {pipeline_mode = #tpu.pipeline_mode<synchronous>, transform_indices = @transform_2, window_bounds = array<i64: 32, 1>}, {pipeline_mode = #tpu.pipeline_mode<synchronous>, transform_indices = @transform_3, window_bounds = array<i64: 32, 32>}, {pipeline_mode = #tpu.pipeline_mode<synchronous>, transform_indices = @transform_4, window_bounds = array<i64: 32, 1>}, {pipeline_mode = #tpu.pipeline_mode<synchronous>, transform_indices = @transform_5, window_bounds = array<i64: 4, 32>}, {pipeline_mode = #tpu.pipeline_mode<synchronous>, transform_indices = @transform_6, window_bounds = array<i64: 4, 1>}, {transform_indices = @transform_7, window_bounds = array<i64: 4, 256>}]} {
    %c0 = arith.constant 0 : index
    %c0_0 = arith.constant 0 : index
    %0 = vector.load %arg1[%c0, %c0_0] : memref<8x256xf32, #tpu.memory_space<vmem>>, vector<8x256xf32>
    %c0_1 = arith.constant 0 : index
    %c0_2 = arith.constant 0 : index
    %1 = vector.load %arg2[%c0_1, %c0_2] : memref<32x8xf32, #tpu.memory_space<vmem>>, vector<32x8xf32>
    %cst = arith.constant dense<0.000000e+00> : vector<32x256xf32>
    %2 = tpu.matmul %1, %0, %cst {dimension_numbers = #tpu.dot_dimension_numbers<[1], [0], [0], [1], [0, 0, 1, 1], [], []>} : vector<32x8xf32>, vector<8x256xf32>, vector<32x256xf32> -> vector<32x256xf32>
    %c0_3 = arith.constant 0 : index
    %c0_4 = arith.constant 0 : index
    %3 = vector.load %arg3[%c0_3, %c0_4] : memref<32x1xf32, #tpu.memory_space<vmem>>, vector<32x1xf32>
    %4 = vector.broadcast %3 : vector<32x1xf32> to vector<32x256xf32>
    %5 = arith.addf %2, %4 : vector<32x256xf32>
    %6 = arith.negf %5 : vector<32x256xf32>
    %7 = math.exp %6 : vector<32x256xf32>
    %cst_5 = arith.constant 1.000000e+00 : f32
    %8 = vector.broadcast %cst_5 : f32 to vector<32x256xf32>
    %9 = arith.addf %8, %7 : vector<32x256xf32>
    %10 = arith.divf %8, %9 : vector<32x256xf32>
    %c0_6 = arith.constant 0 : index
    %c0_7 = arith.constant 0 : index
    %11 = vector.load %arg4[%c0_6, %c0_7] : memref<32x32xf32, #tpu.memory_space<vmem>>, vector<32x32xf32>
    %cst_8 = arith.constant dense<0.000000e+00> : vector<32x256xf32>
    %12 = tpu.matmul %11, %10, %cst_8 {dimension_numbers = #tpu.dot_dimension_numbers<[1], [0], [0], [1], [0, 0, 1, 1], [], []>} : vector<32x32xf32>, vector<32x256xf32>, vector<32x256xf32> -> vector<32x256xf32>
    %c0_9 = arith.constant 0 : index
    %c0_10 = arith.constant 0 : index
    %13 = vector.load %arg5[%c0_9, %c0_10] : memref<32x1xf32, #tpu.memory_space<vmem>>, vector<32x1xf32>
    %14 = vector.broadcast %13 : vector<32x1xf32> to vector<32x256xf32>
    %15 = arith.addf %12, %14 : vector<32x256xf32>
    %cst_11 = arith.constant 0.000000e+00 : f32
    %16 = vector.broadcast %cst_11 : f32 to vector<32x256xf32>
    %17 = arith.maximumf %15, %16 : vector<32x256xf32>
    %c0_12 = arith.constant 0 : index
    %c0_13 = arith.constant 0 : index
    %18 = vector.load %arg6[%c0_12, %c0_13] : memref<4x32xf32, #tpu.memory_space<vmem>>, vector<4x32xf32>
    %cst_14 = arith.constant dense<0.000000e+00> : vector<4x256xf32>
    %19 = tpu.matmul %18, %17, %cst_14 {dimension_numbers = #tpu.dot_dimension_numbers<[1], [0], [0], [1], [0, 0, 1, 1], [], []>} : vector<4x32xf32>, vector<32x256xf32>, vector<4x256xf32> -> vector<4x256xf32>
    %c0_15 = arith.constant 0 : index
    %c0_16 = arith.constant 0 : index
    %20 = vector.load %arg7[%c0_15, %c0_16] : memref<4x1xf32, #tpu.memory_space<vmem>>, vector<4x1xf32>
    %21 = vector.broadcast %20 : vector<4x1xf32> to vector<4x256xf32>
    %22 = arith.addf %19, %21 : vector<4x256xf32>
    %c0_17 = arith.constant 0 : index
    %c0_18 = arith.constant 0 : index
    %23 = vector.load %arg8[%c0_17, %c0_18] : memref<4x256xf32, #tpu.memory_space<vmem>>, vector<4x256xf32>
    tpu.vector_store %arg8[%c0_17, %c0_18], %22 {strides = array<i32>} : memref<4x256xf32, #tpu.memory_space<vmem>>, vector<4x256xf32>,
    return
  }
  func.func @transform_0(%arg0: i32) -> (i32, i32) {
    %c0_i32 = arith.constant 0 : i32
    %c0_i32_0 = arith.constant 0 : i32
    return %c0_i32, %arg0 : i32, i32
  }
  func.func @transform_1(%arg0: i32) -> (i32, i32) {
    %c0_i32 = arith.constant 0 : i32
    %c0_i32_0 = arith.constant 0 : i32
    %c0_i32_1 = arith.constant 0 : i32
    return %c0_i32, %c0_i32_0 : i32, i32
  }
  func.func @transform_2(%arg0: i32) -> (i32, i32) {
    %c0_i32 = arith.constant 0 : i32
    %c0_i32_0 = arith.constant 0 : i32
    %c0_i32_1 = arith.constant 0 : i32
    return %c0_i32, %c0_i32_0 : i32, i32
  }
  func.func @transform_3(%arg0: i32) -> (i32, i32) {
    %c0_i32 = arith.constant 0 : i32
    %c0_i32_0 = arith.constant 0 : i32
    %c0_i32_1 = arith.constant 0 : i32
    return %c0_i32, %c0_i32_0 : i32, i32
  }
  func.func @transform_4(%arg0: i32) -> (i32, i32) {
    %c0_i32 = arith.constant 0 : i32
    %c0_i32_0 = arith.constant 0 : i32
    %c0_i32_1 = arith.constant 0 : i32
    return %c0_i32, %c0_i32_0 : i32, i32
  }
  func.func @transform_5(%arg0: i32) -> (i32, i32) {
    %c0_i32 = arith.constant 0 : i32
    %c0_i32_0 = arith.constant 0 : i32
    %c0_i32_1 = arith.constant 0 : i32
    return %c0_i32, %c0_i32_0 : i32, i32
  }
  func.func @transform_6(%arg0: i32) -> (i32, i32) {
    %c0_i32 = arith.constant 0 : i32
    %c0_i32_0 = arith.constant 0 : i32
    %c0_i32_1 = arith.constant 0 : i32
    return %c0_i32, %c0_i32_0 : i32, i32
  }
  func.func @transform_7(%arg0: i32) -> (i32, i32) {
    %c0_i32 = arith.constant 0 : i32
    %c0_i32_0 = arith.constant 0 : i32
    return %c0_i32, %arg0 : i32, i32
  }
}

</mosaic_0001>

<llo_original>
// kernel: net_forward.1
$region0: #{net_forward.1}
  #allocation0 [shape = 'u32[]', space=smem, size = 0x4, offset = 0x4, fixed_abs, tag = 'smem constant byte address 0x4 - core index']
  #allocation1 [shape = 'u32[144,128]{1,0:T(1,128)}', space=vmem, size = 0x12000, scoped, tag = 'internal scratch']
  %s0 = inlined_call_operand.vmem [shape: f32[8,300], index: 0, kind: input, shape index: {}]
  %s1 = inlined_call_operand.vmem [shape: f32[32,8], index: 1, kind: input, shape index: {}]
  %s2 = inlined_call_operand.vmem [shape: f32[32,1], index: 2, kind: input, shape index: {}]
  %s3 = inlined_call_operand.vmem [shape: f32[32,32], index: 3, kind: input, shape index: {}]
  %s4 = inlined_call_operand.vmem [shape: f32[32,1], index: 4, kind: input, shape index: {}]
  %s5 = inlined_call_operand.vmem [shape: f32[4,32], index: 5, kind: input, shape index: {}]
  %s6 = inlined_call_operand.vmem [shape: f32[4,1], index: 6, kind: input, shape index: {}]
  %s7 = inlined_call_operand.hbm [shape: f32[4,300], index: 7, kind: output, shape index: {}]
  %s8 = sld [smem:[#allocation0]]
  $region61: #{net_forward.1} parent=0
    _
  %s10 = ssub.s32 1, %s8
  %s11 = scalar_select 0, %s10, %s8
  $region1: #{net_forward.1} parent=0
    #allocation2 [shape = 'u8[8192]{0}', space=vmem, size = 0x2000, scoped, tag = 'output window, operand 0']
    #allocation3 [shape = 's32[2]{0}', space=sflag, size = 0x8, scoped, tag = 'scoped memory for net_forward.1']
    %12 = vsyncpa [#allocation3], 0
    %s13 = scalar_lea.sflag [#allocation3], 1
    %14 = vsyncpa %s13, 0
    loop: start=0, step=1, limit=4
    $region2: #{net_forward.1} parent=1 // loop_pre_header
      _
    $region3: #{net_forward.1} parent=1 // loop_header
      %s16 = sphi 0, %s20
      %p17 = scmp.ge.s32.totalorder %s16, 4
      %s26 = sphi 0, %s28
      %s29 = sphi 0, %s26
      %s30 = sphi 0, %s29
      %s46 = sphi 0, %s30
      %s50 = sphi 0, %s50
      %s52 = sphi 0, %s50
      %s53 = sphi 0, %s52
      %s67 = sphi 0, %s53
      %s71 = sphi 0, %s71
      %s73 = sphi 0, %s71
      %s74 = sphi 0, %s73
      %s88 = sphi 0, %s74
      %s92 = sphi 0, %s92
      %s94 = sphi 0, %s92
      %s95 = sphi 0, %s94
      %s109 = sphi 0, %s95
      %s113 = sphi 0, %s113
      %s115 = sphi 0, %s113
      %s116 = sphi 0, %s115
      %s130 = sphi 0, %s116
      %s134 = sphi 0, %s134
      %s136 = sphi 0, %s134
      %s137 = sphi 0, %s136
      %s151 = sphi 0, %s137
      %s155 = sphi 0, %s155
      %s157 = sphi 0, %s155
      %s158 = sphi 0, %s157
      %s172 = sphi 0, %s158
      %s178 = sphi 0, %s180
      %s181 = sphi 0, %s178
      %s182 = sphi 0, %s181
      %s198 = sphi 0, %s182
    $region4: #{net_forward.1} parent=1 // loop_header_branch
      %19 = sbr.rel (%p17) target = $region8
    $region5: #{net_forward.1} parent=1 // loop_body
      %s21 = ssub.s32 %s16, 1
      %s22 = ssub.s32 %s16, 2
      %s23 = sadd.s32 %s16, 1
      %s24 = ssub.s32 %s16, %s23
      %p25 = scmp.eq.s32.totalorder %s24, 0
      %s27 = sadd.s32 %s26, 1
      %s28 = scalar_select %p25, %s26, %s27
      %p31 = pneg %p25
      %p32 = scmp.eq.s32.totalorder %s16, 1
      %p33 = por %p31, %p32
      %p34 = scmp.ne.s32.totalorder %s26, %s29
      %p35 = scmp.eq.s32.totalorder %s16, 0
      %p36 = por %p34, %p35
      %p37 = scmp.ne.s32.totalorder %s26, %s29
      %p38 = scmp.eq.s32.totalorder %s21, 1
      %p39 = por %p37, %p38
      %p40 = scmp.ne.s32.totalorder %s29, %s30
      %p41 = scmp.eq.s32.totalorder %s21, 0
      %p42 = por %p40, %p41
      %p43 = scmp.ne.s32.totalorder %s29, %s30
      %p44 = scmp.eq.s32.totalorder %s22, 1
      %p45 = por %p43, %p44
      %p47 = scmp.ne.s32.totalorder %s30, %s46
      %p48 = scmp.eq.s32.totalorder %s22, 0
      %p49 = por %p47, %p48
      %s51 = sadd.s32 %s50, 1
      %p54 = scmp.eq.s32.totalorder %s16, 1
      %p55 = scmp.ne.s32.totalorder %s50, %s52
      %p56 = scmp.eq.s32.totalorder %s16, 0
      %p57 = por %p55, %p56
      %p58 = scmp.ne.s32.totalorder %s50, %s52
      %p59 = scmp.eq.s32.totalorder %s21, 1
      %p60 = por %p58, %p59
      %p61 = scmp.ne.s32.totalorder %s52, %s53
      %p62 = scmp.eq.s32.totalorder %s21, 0
      %p63 = por %p61, %p62
      %p64 = scmp.ne.s32.totalorder %s52, %s53
      %p65 = scmp.eq.s32.totalorder %s22, 1
      %p66 = por %p64, %p65
      %p68 = scmp.ne.s32.totalorder %s53, %s67
      %p69 = scmp.eq.s32.totalorder %s22, 0
      %p70 = por %p68, %p69
      %s72 = sadd.s32 %s71, 1
      %p75 = scmp.eq.s32.totalorder %s16, 1
      %p76 = scmp.ne.s32.totalorder %s71, %s73
      %p77 = scmp.eq.s32.totalorder %s16, 0
      %p78 = por %p76, %p77
      %p79 = scmp.ne.s32.totalorder %s71, %s73
      %p80 = scmp.eq.s32.totalorder %s21, 1
      %p81 = por %p79, %p80
      %p82 = scmp.ne.s32.totalorder %s73, %s74
      %p83 = scmp.eq.s32.totalorder %s21, 0
      %p84 = por %p82, %p83
      %p85 = scmp.ne.s32.totalorder %s73, %s74
      %p86 = scmp.eq.s32.totalorder %s22, 1
      %p87 = por %p85, %p86
      %p89 = scmp.ne.s32.totalorder %s74, %s88
      %p90 = scmp.eq.s32.totalorder %s22, 0
      %p91 = por %p89, %p90
      %s93 = sadd.s32 %s92, 1
      %p96 = scmp.eq.s32.totalorder %s16, 1
      %p97 = scmp.ne.s32.totalorder %s92, %s94
      %p98 = scmp.eq.s32.totalorder %s16, 0
      %p99 = por %p97, %p98
      %p100 = scmp.ne.s32.totalorder %s92, %s94
      %p101 = scmp.eq.s32.totalorder %s21, 1
      %p102 = por %p100, %p101
      %p103 = scmp.ne.s32.totalorder %s94, %s95
      %p104 = scmp.eq.s32.totalorder %s21, 0
      %p105 = por %p103, %p104
      %p106 = scmp.ne.s32.totalorder %s94, %s95
      %p107 = scmp.eq.s32.totalorder %s22, 1
      %p108 = por %p106, %p107
      %p110 = scmp.ne.s32.totalorder %s95, %s109
      %p111 = scmp.eq.s32.totalorder %s22, 0
      %p112 = por %p110, %p111
      %s114 = sadd.s32 %s113, 1
      %p117 = scmp.eq.s32.totalorder %s16, 1
      %p118 = scmp.ne.s32.totalorder %s113, %s115
      %p119 = scmp.eq.s32.totalorder %s16, 0
      %p120 = por %p118, %p119
      %p121 = scmp.ne.s32.totalorder %s113, %s115
      %p122 = scmp.eq.s32.totalorder %s21, 1
      %p123 = por %p121, %p122
      %p124 = scmp.ne.s32.totalorder %s115, %s116
      %p125 = scmp.eq.s32.totalorder %s21, 0
      %p126 = por %p124, %p125
      %p127 = scmp.ne.s32.totalorder %s115, %s116
      %p128 = scmp.eq.s32.totalorder %s22, 1
      %p129 = por %p127, %p128
      %p131 = scmp.ne.s32.totalorder %s116, %s130
      %p132 = scmp.eq.s32.totalorder %s22, 0
      %p133 = por %p131, %p132
      %s135 = sadd.s32 %s134, 1
      %p138 = scmp.eq.s32.totalorder %s16, 1
      %p139 = scmp.ne.s32.totalorder %s134, %s136
      %p140 = scmp.eq.s32.totalorder %s16, 0
      %p141 = por %p139, %p140
      %p142 = scmp.ne.s32.totalorder %s134, %s136
      %p143 = scmp.eq.s32.totalorder %s21, 1
      %p144 = por %p142, %p143
      %p145 = scmp.ne.s32.totalorder %s136, %s137
      %p146 = scmp.eq.s32.totalorder %s21, 0
      %p147 = por %p145, %p146
      %p148 = scmp.ne.s32.totalorder %s136, %s137
      %p149 = scmp.eq.s32.totalorder %s22, 1
      %p150 = por %p148, %p149
      %p152 = scmp.ne.s32.totalorder %s137, %s151
      %p153 = scmp.eq.s32.totalorder %s22, 0
      %p154 = por %p152, %p153
      %s156 = sadd.s32 %s155, 1
      %p159 = scmp.eq.s32.totalorder %s16, 1
      %p160 = scmp.ne.s32.totalorder %s155, %s157
      %p161 = scmp.eq.s32.totalorder %s16, 0
      %p162 = por %p160, %p161
      %p163 = scmp.ne.s32.totalorder %s155, %s157
      %p164 = scmp.eq.s32.totalorder %s21, 1
      %p165 = por %p163, %p164
      %p166 = scmp.ne.s32.totalorder %s157, %s158
      %p167 = scmp.eq.s32.totalorder %s21, 0
      %p168 = por %p166, %p167
      %p169 = scmp.ne.s32.totalorder %s157, %s158
      %p170 = scmp.eq.s32.totalorder %s22, 1
      %p171 = por %p169, %p170
      %p173 = scmp.ne.s32.totalorder %s158, %s172
      %p174 = scmp.eq.s32.totalorder %s22, 0
      %p175 = por %p173, %p174
      %s176 = ssub.s32 %s16, %s23
      %p177 = scmp.eq.s32.totalorder %s176, 0
      %s179 = sadd.s32 %s178, 1
      %s180 = scalar_select %p177, %s178, %s179
      %p183 = pneg %p177
      %p184 = scmp.eq.s32.totalorder %s16, 1
      %p185 = por %p183, %p184
      %p186 = scmp.ne.s32.totalorder %s178, %s181
      %p187 = scmp.eq.s32.totalorder %s16, 0
      %p188 = por %p186, %p187
      %p189 = scmp.ne.s32.totalorder %s178, %s181
      %p190 = scmp.eq.s32.totalorder %s21, 1
      %p191 = por %p189, %p190
      %p192 = scmp.ne.s32.totalorder %s181, %s182
      %p193 = scmp.eq.s32.totalorder %s21, 0
      %p194 = por %p192, %p193
      %p195 = scmp.ne.s32.totalorder %s181, %s182
      %p196 = scmp.eq.s32.totalorder %s22, 1
      %p197 = por %p195, %p196
      %p199 = scmp.ne.s32.totalorder %s182, %s198
      %p200 = scmp.eq.s32.totalorder %s22, 0
      %p201 = por %p199, %p200
      %p202 = scmp.le.s32.totalorder 1, %s16
      %p203 = scmp.lt.s32.totalorder %s16, 3
      %p204 = pnand %p202, %p203
      %p205 = pneg %p204
      // Predicated region
      $region9: #{net_forward.1} parent=5 // pred_check
        _
      $region10: #{net_forward.1} parent=5 // pred_check_branch
        %207 = sbr.rel (%p204) target = $region12
      $region11: #{net_forward.1} parent=5 // pred_region
        %s208 = ssub.s32 %s16, 1
        // Predicated region
        $region13: #{net_forward.1} parent=11 // pred_check
          %p209 = pneg %p63
        $region14: #{net_forward.1} parent=11 // pred_check_branch
          %211 = sbr.rel (%p209) target = $region16
        $region15: #{net_forward.1} parent=11 // pred_region
          _
        $region16: #{net_forward.1} parent=11 // pred_fallthru
          _
        // Predicated region
        $region17: #{net_forward.1} parent=11 // pred_check
          %p212 = pneg %p84
        $region18: #{net_forward.1} parent=11 // pred_check_branch
          %214 = sbr.rel (%p212) target = $region20
        $region19: #{net_forward.1} parent=11 // pred_region
          _
        $region20: #{net_forward.1} parent=11 // pred_fallthru
          _
        // Predicated region
        $region21: #{net_forward.1} parent=11 // pred_check
          %p215 = pneg %p105
        $region22: #{net_forward.1} parent=11 // pred_check_branch
          %217 = sbr.rel (%p215) target = $region24
        $region23: #{net_forward.1} parent=11 // pred_region
          _
        $region24: #{net_forward.1} parent=11 // pred_fallthru
          _
        // Predicated region
        $region25: #{net_forward.1} parent=11 // pred_check
          %p218 = pneg %p126
        $region26: #{net_forward.1} parent=11 // pred_check_branch
          %220 = sbr.rel (%p218) target = $region28
        $region27: #{net_forward.1} parent=11 // pred_region
          _
        $region28: #{net_forward.1} parent=11 // pred_fallthru
          _
        // Predicated region
        $region29: #{net_forward.1} parent=11 // pred_check
          %p221 = pneg %p147
        $region30: #{net_forward.1} parent=11 // pred_check_branch
          %223 = sbr.rel (%p221) target = $region32
        $region31: #{net_forward.1} parent=11 // pred_region
          _
        $region32: #{net_forward.1} parent=11 // pred_fallthru
          _
        // Predicated region
        $region33: #{net_forward.1} parent=11 // pred_check
          %p224 = pneg %p168
        $region34: #{net_forward.1} parent=11 // pred_check_branch
          %226 = sbr.rel (%p224) target = $region36
        $region35: #{net_forward.1} parent=11 // pred_region
          _
        $region36: #{net_forward.1} parent=11 // pred_fallthru
          _
      $region12: #{net_forward.1} parent=5 // pred_fallthru
        _
      %p227 = scmp.lt.s32.totalorder %s16, 2
      // Predicated region
      $region37: #{net_forward.1} parent=5 // pred_check
        %p228 = pneg %p227
      $region38: #{net_forward.1} parent=5 // pred_check_branch
        %230 = sbr.rel (%p228) target = $region40
      $region39: #{net_forward.1} parent=5 // pred_region
        // Predicated region
        $region41: #{net_forward.1} parent=39 // pred_check
          %p231 = pneg %p36
        $region42: #{net_forward.1} parent=39 // pred_check_branch
          %233 = sbr.rel (%p231) target = $region44
        $region43: #{net_forward.1} parent=39 // pred_region
          %s234 = smul.u32 2, %s16
          %s235 = ssub.s32 3, %s234
          %p236 = scmp.lt.s32.totalorder %s235, 2
          %s237 = scalar_select %p236, %s235, 2
          %s238 = smul.u32 128, %s237
          %p239 = scmp.lt.s32.totalorder %s234, 2
          %s240 = scalar_select %p239, %s234, 2
          %s241 = smul.addr %s240, 8
          %s242 = scalar_lea.vmem %s0, %s241
          %s243 = smul.u32 2, %s16
          %s244 = ssub.s32 3, %s243
          %p245 = scmp.lt.s32.totalorder %s244, 2
          %s246 = scalar_select %p245, %s244, 2
          %s247 = smul.u32 128, %s246
        $region44: #{net_forward.1} parent=39 // pred_fallthru
          _
      $region40: #{net_forward.1} parent=5 // pred_fallthru
        _
      %p248 = scmp.le.s32.totalorder 1, %s16
      %p249 = scmp.lt.s32.totalorder %s16, 3
      %p250 = pnand %p248, %p249
      %p251 = pneg %p250
      // Predicated region
      $region45: #{net_forward.1} parent=5 // pred_check
        _
      $region46: #{net_forward.1} parent=5 // pred_check_branch
        %253 = sbr.rel (%p250) target = $region48
      $region47: #{net_forward.1} parent=5 // pred_region
        %s254 = ssub.s32 %s16, 1
        %s255 = smul.u32 2, %s21
        %s256 = ssub.s32 3, %s255
        %p257 = scmp.lt.s32.totalorder %s256, 2
        %s258 = scalar_select %p257, %s256, 2
        %s259 = smul.u32 128, %s258
        %p260 = scmp.lt.s32.totalorder %s255, 2
        %s261 = scalar_select %p260, %s255, 2
        %s262 = smul.addr %s261, 8
        %s263 = scalar_lea.vmem %s0, %s262
        %p264 = pneg %p42
        %p265 = pneg %p39
        %p266 = pneg %p63
        %p267 = pneg %p60
        %p268 = pneg %p84
        %p269 = pneg %p81
        %p270 = pneg %p105
        %p271 = pneg %p102
        %p272 = pneg %p126
        %p273 = pneg %p123
        %p274 = pneg %p147
        %p275 = pneg %p144
        %p276 = pneg %p168
        %p277 = pneg %p165
        %p278 = pneg %p194
        %p279 = pneg %p191
        %s280 = sand.u32 %s181, 1
        %s281 = scalar_lea.sflag [#allocation3], %s280
        %s282 = sand.u32 %s181, 1
        %s283 = smul.addr %s282, 8
        %s284 = scalar_lea.vmem [#allocation2], %s283
        %s285 = smul.u32 2, %s21
        %s286 = ssub.s32 3, %s285
        %p287 = scmp.lt.s32.totalorder %s286, 2
        %s288 = scalar_select %p287, %s286, 2
        %s289 = smul.u32 128, %s288
        %p290 = scmp.lt.s32.totalorder %s285, 2
        %s291 = scalar_select %p290, %s285, 2
        %s292 = smul.addr %s291, 8
        %s293 = scalar_lea.vmem %s0, %s292
        %s294 = smul.u32 2, %s21
        %s295 = ssub.s32 3, %s294
        %p296 = scmp.lt.s32.totalorder %s295, 2
        %s297 = scalar_select %p296, %s295, 2
        %s298 = smul.u32 128, %s297
        %s299 = smul.u32 2, %s21
        %s300 = ssub.s32 3, %s299
        %p301 = scmp.lt.s32.totalorder %s300, 2
        %s302 = scalar_select %p301, %s300, 2
        %s303 = smul.u32 64, %s302
        %v304 = vld [vmem:[%s293] sm:$0xff]
        %v305 = vld [vmem:[%s293 + $0x8] sm:$0xff]
        %v306 = vld [vmem:[%s1] sm:$0xff]
        %v307 = vld [vmem:[%s1 + $0x8] sm:$0xff]
        %v308 = vld [vmem:[%s1 + $0x10] sm:$0xff]
        %v309 = vld [vmem:[%s1 + $0x18] sm:$0xff]
        %v310 = vld [vmem:[%s2] sm:$0xff]
        %v311 = vld [vmem:[%s2 + $0x8] sm:$0xff]
        %v312 = vld [vmem:[%s2 + $0x10] sm:$0xff]
        %v313 = vld [vmem:[%s2 + $0x18] sm:$0xff]
        %315 = vset.pattern.permute.xlu0 0
        %316 = vperm.xlu0 %315, %v310
        %v317 = vpop.permute.xlu0 %316
        %320 = vset.pattern.permute.xlu0 0
        %321 = vperm.xlu0 %320, %v311
        %v322 = vpop.permute.xlu0 %321
        %325 = vset.pattern.permute.xlu0 0
        %326 = vperm.xlu0 %325, %v312
        %v327 = vpop.permute.xlu0 %326
        %330 = vset.pattern.permute.xlu0 0
        %331 = vperm.xlu0 %330, %v313
        %v332 = vpop.permute.xlu0 %331
        %vm334 = vcmask 64512
        %v336 = vsel %vm334, %v306, 0
        %v339 = vsel %vm334, %v307, 0
        %v342 = vsel %vm334, %v308, 0
        %v345 = vsel %vm334, %v309, 0
        %347 = vmatprep.subr.mxu0 %v305
        %348 = vmatpush1.msra.mxu0 %v304
        %349 = vmatprep.subr.mxu0 0.0
        %350 = vmatpush1.msra.mxu0 0.0
        %351 = vmatprep.subr.mxu0 0.0
        %352 = vmatpush1.msra.mxu0 0.0
        %353 = vmatprep.subr.mxu0 0.0
        %354 = vmatpush1.msra.mxu0 0.0
        %355 = vmatprep.subr.mxu0 0.0
        %356 = vmatpush1.msra.mxu0 0.0
        %357 = vmatprep.subr.mxu0 0.0
        %358 = vmatpush1.msra.mxu0 0.0
        %359 = vmatprep.subr.mxu0 0.0
        %360 = vmatpush1.msra.mxu0 0.0
        %361 = vmatprep.subr.mxu0 0.0
        %362 = vmatpush1.msra.mxu0 0.0
        %363 = vmatprep.subr.mxu0 0.0
        %364 = vmatpush1.msra.mxu0 0.0
        %365 = vmatprep.subr.mxu0 0.0
        %366 = vmatpush1.msra.mxu0 0.0
        %367 = vmatprep.subr.mxu0 0.0
        %368 = vmatpush1.msra.mxu0 0.0
        %369 = vmatprep.subr.mxu0 0.0
        %370 = vmatpush1.msra.mxu0 0.0
        %371 = vmatprep.subr.mxu0 0.0
        %372 = vmatpush1.msra.mxu0 0.0
        %373 = vmatprep.subr.mxu0 0.0
        %374 = vmatpush1.msra.mxu0 0.0
        %375 = vmatprep.subr.mxu0 0.0
        %376 = vmatpush1.msra.mxu0 0.0
        %377 = vmatprep.subr.mxu0 0.0
        %378 = vmatpush1.msra.mxu0 0.0
        %379 = vmatprep.subr.mxu0 0.0
        %380 = vmatpush1.msra.mxu0 0.0
        %381 = vmatprep.subr.mxu0 0.0
        %382 = vmatpush1.msra.mxu0 0.0
        %383 = vmatprep.subr.mxu0 0.0
        %384 = vmatpush1.msra.mxu0 0.0
        %385 = vmatprep.subr.mxu0 0.0
        %386 = vmatpush1.msra.mxu0 0.0
        %387 = vmatprep.subr.mxu0 0.0
        %388 = vmatpush1.msra.mxu0 0.0
        %389 = vmatprep.subr.mxu0 0.0
        %390 = vmatpush1.msra.mxu0 0.0
        %391 = vmatprep.subr.mxu0 0.0
        %392 = vmatpush1.msra.mxu0 0.0
        %393 = vmatprep.subr.mxu0 0.0
        %394 = vmatpush1.msra.mxu0 0.0
        %395 = vmatprep.subr.mxu0 0.0
        %396 = vmatpush1.msra.mxu0 0.0
        %397 = vmatprep.subr.mxu0 0.0
        %398 = vmatpush1.msra.mxu0 0.0
        %399 = vmatprep.subr.mxu0 0.0
        %400 = vmatpush1.msra.mxu0 0.0
        %401 = vmatprep.subr.mxu0 0.0
        %402 = vmatpush1.msra.mxu0 0.0
        %403 = vmatprep.subr.mxu0 0.0
        %404 = vmatpush1.msra.mxu0 0.0
        %405 = vmatprep.subr.mxu0 0.0
        %406 = vmatpush1.msra.mxu0 0.0
        %407 = vmatprep.subr.mxu0 0.0
        %408 = vmatpush1.msra.mxu0 0.0
        %409 = vmatprep.subr.mxu0 0.0
        %410 = vmatpush1.msra.mxu0 0.0
        %411 = vmatprep.mubr.f32.mxu0 0.0
        %412 = vmatmul.mubr.f32.gmra.mrb[0].mxu0 %v336
        %v413 = vpop.f32.mrb[0].mxu0
        %v414 = vadd.f32 %v317, %v413
        %v415 = vpop.f32.mrb[0].mxu0
        %v416 = vadd.f32 %v317, %v415
        %417 = vmatprep.mubr.f32.mxu0 0.0
        %418 = vmatmul.mubr.f32.gmra.mrb[0].mxu0 %v339
        %v419 = vpop.f32.mrb[0].mxu0
        %v420 = vadd.f32 %v322, %v419
        %v421 = vpop.f32.mrb[0].mxu0
        %v422 = vadd.f32 %v322, %v421
        %423 = vmatprep.mubr.f32.mxu0 0.0
        %424 = vmatmul.mubr.f32.gmra.mrb[0].mxu0 %v342
        %v425 = vpop.f32.mrb[0].mxu0
        %v426 = vadd.f32 %v327, %v425
        %v427 = vpop.f32.mrb[0].mxu0
        %v428 = vadd.f32 %v327, %v427
        %429 = vmatprep.mubr.f32.mxu0 0.0
        %430 = vmatmul.mubr.f32.gmra.mrb[0].mxu0 %v345
        %v431 = vpop.f32.mrb[0].mxu0
        %v432 = vadd.f32 %v332, %v431
        %v433 = vpop.f32.mrb[0].mxu0
        %v434 = vadd.f32 %v332, %v433
        %435 = vdwg.mxu0
        %v436 = vxor.u32 %v414, 2147483648
        %v437 = vxor.u32 %v416, 2147483648
        %v438 = vxor.u32 %v420, 2147483648
        %v439 = vxor.u32 %v422, 2147483648
        %v440 = vxor.u32 %v426, 2147483648
        %v441 = vxor.u32 %v428, 2147483648
        %v442 = vxor.u32 %v432, 2147483648
        %v443 = vxor.u32 %v434, 2147483648
        %v444 = vmul.f32 %v436, 1.442695
        %v445 = vpow.pop %v444
        %v446 = vmul.f32 %v437, 1.442695
        %v447 = vpow.pop %v446
        %v448 = vmul.f32 %v438, 1.442695
        %v449 = vpow.pop %v448
        %v450 = vmul.f32 %v439, 1.442695
        %v451 = vpow.pop %v450
        %v452 = vmul.f32 %v440, 1.442695
        %v453 = vpow.pop %v452
        %v454 = vmul.f32 %v441, 1.442695
        %v455 = vpow.pop %v454
        %v456 = vmul.f32 %v442, 1.442695
        %v457 = vpow.pop %v456
        %v458 = vmul.f32 %v443, 1.442695
        %v459 = vpow.pop %v458
        %v460 = vadd.f32 %v445, 1.0
        %v461 = vadd.f32 %v447, 1.0
        %v462 = vadd.f32 %v449, 1.0
        %v463 = vadd.f32 %v451, 1.0
        %v464 = vadd.f32 %v453, 1.0
        %v465 = vadd.f32 %v455, 1.0
        %v466 = vadd.f32 %v457, 1.0
        %v467 = vadd.f32 %v459, 1.0
        %v468 = vrcp.pop %v460
        %v469 = vmul.f32 1.0, %v468
        %v470 = vrcp.pop %v461
        %v471 = vmul.f32 1.0, %v470
        %v472 = vrcp.pop %v462
        %v473 = vmul.f32 1.0, %v472
        %v474 = vrcp.pop %v463
        %v475 = vmul.f32 1.0, %v474
        %v476 = vrcp.pop %v464
        %v477 = vmul.f32 1.0, %v476
        %v478 = vrcp.pop %v465
        %v479 = vmul.f32 1.0, %v478
        %v480 = vrcp.pop %v466
        %v481 = vmul.f32 1.0, %v480
        %v482 = vrcp.pop %v467
        %v483 = vmul.f32 1.0, %v482
        %v484 = vld [vmem:[%s3] sm:$0xff]
        %v485 = vld [vmem:[%s3 + $0x8] sm:$0xff]
        %v486 = vld [vmem:[%s3 + $0x10] sm:$0xff]
        %v487 = vld [vmem:[%s3 + $0x18] sm:$0xff]
        %v488 = vld [vmem:[%s4] sm:$0xff]
        %v489 = vld [vmem:[%s4 + $0x8] sm:$0xff]
        %v490 = vld [vmem:[%s4 + $0x10] sm:$0xff]
        %v491 = vld [vmem:[%s4 + $0x18] sm:$0xff]
        %493 = vset.pattern.permute.xlu0 0
        %494 = vperm.xlu0 %493, %v488
        %v495 = vpop.permute.xlu0 %494
        %498 = vset.pattern.permute.xlu0 0
        %499 = vperm.xlu0 %498, %v489
        %v500 = vpop.permute.xlu0 %499
        %503 = vset.pattern.permute.xlu0 0
        %504 = vperm.xlu0 %503, %v490
        %v505 = vpop.permute.xlu0 %504
        %508 = vset.pattern.permute.xlu0 0
        %509 = vperm.xlu0 %508, %v491
        %v510 = vpop.permute.xlu0 %509
        %vm512 = vcmask 261120
        %v514 = vsel %vm512, %v484, 0
        %v517 = vsel %vm512, %v485, 0
        %v520 = vsel %vm512, %v486, 0
        %v523 = vsel %vm512, %v487, 0
        %525 = vmatprep.subr.mxu0 %v471
        %526 = vmatpush1.msra.mxu0 %v469
        %527 = vmatprep.subr.mxu0 %v475
        %528 = vmatpush1.msra.mxu0 %v473
        %529 = vmatprep.subr.mxu0 %v479
        %530 = vmatpush1.msra.mxu0 %v477
        %531 = vmatprep.subr.mxu0 %v483
        %532 = vmatpush1.msra.mxu0 %v481
        %533 = vmatprep.subr.mxu0 0.0
        %534 = vmatpush1.msra.mxu0 0.0
        %535 = vmatprep.subr.mxu0 0.0
        %536 = vmatpush1.msra.mxu0 0.0
        %537 = vmatprep.subr.mxu0 0.0
        %538 = vmatpush1.msra.mxu0 0.0
        %539 = vmatprep.subr.mxu0 0.0
        %540 = vmatpush1.msra.mxu0 0.0
        %541 = vmatprep.subr.mxu0 0.0
        %542 = vmatpush1.msra.mxu0 0.0
        %543 = vmatprep.subr.mxu0 0.0
        %544 = vmatpush1.msra.mxu0 0.0
        %545 = vmatprep.subr.mxu0 0.0
        %546 = vmatpush1.msra.mxu0 0.0
        %547 = vmatprep.subr.mxu0 0.0
        %548 = vmatpush1.msra.mxu0 0.0
        %549 = vmatprep.subr.mxu0 0.0
        %550 = vmatpush1.msra.mxu0 0.0
        %551 = vmatprep.subr.mxu0 0.0
        %552 = vmatpush1.msra.mxu0 0.0
        %553 = vmatprep.subr.mxu0 0.0
        %554 = vmatpush1.msra.mxu0 0.0
        %555 = vmatprep.subr.mxu0 0.0
        %556 = vmatpush1.msra.mxu0 0.0
        %557 = vmatprep.subr.mxu0 0.0
        %558 = vmatpush1.msra.mxu0 0.0
        %559 = vmatprep.subr.mxu0 0.0
        %560 = vmatpush1.msra.mxu0 0.0
        %561 = vmatprep.subr.mxu0 0.0
        %562 = vmatpush1.msra.mxu0 0.0
        %563 = vmatprep.subr.mxu0 0.0
        %564 = vmatpush1.msra.mxu0 0.0
        %565 = vmatprep.subr.mxu0 0.0
        %566 = vmatpush1.msra.mxu0 0.0
        %567 = vmatprep.subr.mxu0 0.0
        %568 = vmatpush1.msra.mxu0 0.0
        %569 = vmatprep.subr.mxu0 0.0
        %570 = vmatpush1.msra.mxu0 0.0
        %571 = vmatprep.subr.mxu0 0.0
        %572 = vmatpush1.msra.mxu0 0.0
        %573 = vmatprep.subr.mxu0 0.0
        %574 = vmatpush1.msra.mxu0 0.0
        %575 = vmatprep.subr.mxu0 0.0
        %576 = vmatpush1.msra.mxu0 0.0
        %577 = vmatprep.subr.mxu0 0.0
        %578 = vmatpush1.msra.mxu0 0.0
        %579 = vmatprep.subr.mxu0 0.0
        %580 = vmatpush1.msra.mxu0 0.0
        %581 = vmatprep.subr.mxu0 0.0
        %582 = vmatpush1.msra.mxu0 0.0
        %583 = vmatprep.subr.mxu0 0.0
        %584 = vmatpush1.msra.mxu0 0.0
        %585 = vmatprep.subr.mxu0 0.0
        %586 = vmatpush1.msra.mxu0 0.0
        %587 = vmatprep.subr.mxu0 0.0
        %588 = vmatpush1.msra.mxu0 0.0
        %589 = vmatprep.mubr.f32.mxu0 0.0
        %590 = vmatmul.mubr.f32.gmra.mrb[0].mxu0 %v514
        %v591 = vpop.f32.mrb[0].mxu0
        %v592 = vadd.f32 %v495, %v591
        %v593 = vpop.f32.mrb[0].mxu0
        %v594 = vadd.f32 %v495, %v593
        %595 = vmatprep.mubr.f32.mxu0 0.0
        %596 = vmatmul.mubr.f32.gmra.mrb[0].mxu0 %v517
        %v597 = vpop.f32.mrb[0].mxu0
        %v598 = vadd.f32 %v500, %v597
        %v599 = vpop.f32.mrb[0].mxu0
        %v600 = vadd.f32 %v500, %v599
        %601 = vmatprep.mubr.f32.mxu0 0.0
        %602 = vmatmul.mubr.f32.gmra.mrb[0].mxu0 %v520
        %v603 = vpop.f32.mrb[0].mxu0
        %v604 = vadd.f32 %v505, %v603
        %v605 = vpop.f32.mrb[0].mxu0
        %v606 = vadd.f32 %v505, %v605
        %607 = vmatprep.mubr.f32.mxu0 0.0
        %608 = vmatmul.mubr.f32.gmra.mrb[0].mxu0 %v523
        %v609 = vpop.f32.mrb[0].mxu0
        %v610 = vadd.f32 %v510, %v609
        %v611 = vpop.f32.mrb[0].mxu0
        %v612 = vadd.f32 %v510, %v611
        %613 = vdwg.mxu0
        %v614 = vmax.f32 %v592, 0.0
        %v615 = vmax.f32 %v594, 0.0
        %v616 = vmax.f32 %v598, 0.0
        %v617 = vmax.f32 %v600, 0.0
        %v618 = vmax.f32 %v604, 0.0
        %v619 = vmax.f32 %v606, 0.0
        %v620 = vmax.f32 %v610, 0.0
        %v621 = vmax.f32 %v612, 0.0
        %v622 = vld [vmem:[%s5] sm:$0xf]
        %v623 = vld [vmem:[%s6] sm:$0xf]
        %625 = vset.pattern.permute.xlu0 0
        %626 = vperm.xlu0 %625, %v623
        %v627 = vpop.permute.xlu0 %626
        %v630 = vsel %vm512, %v622, 0
        %632 = vmatprep.subr.mxu0 %v615
        %633 = vmatpush1.msra.mxu0 %v614
        %634 = vmatprep.subr.mxu0 %v617
        %635 = vmatpush1.msra.mxu0 %v616
        %636 = vmatprep.subr.mxu0 %v619
        %637 = vmatpush1.msra.mxu0 %v618
        %638 = vmatprep.subr.mxu0 %v621
        %639 = vmatpush1.msra.mxu0 %v620
        %640 = vmatprep.subr.mxu0 0.0
        %641 = vmatpush1.msra.mxu0 0.0
        %642 = vmatprep.subr.mxu0 0.0
        %643 = vmatpush1.msra.mxu0 0.0
        %644 = vmatprep.subr.mxu0 0.0
        %645 = vmatpush1.msra.mxu0 0.0
        %646 = vmatprep.subr.mxu0 0.0
        %647 = vmatpush1.msra.mxu0 0.0
        %648 = vmatprep.subr.mxu0 0.0
        %649 = vmatpush1.msra.mxu0 0.0
        %650 = vmatprep.subr.mxu0 0.0
        %651 = vmatpush1.msra.mxu0 0.0
        %652 = vmatprep.subr.mxu0 0.0
        %653 = vmatpush1.msra.mxu0 0.0
        %654 = vmatprep.subr.mxu0 0.0
        %655 = vmatpush1.msra.mxu0 0.0
        %656 = vmatprep.subr.mxu0 0.0
        %657 = vmatpush1.msra.mxu0 0.0
        %658 = vmatprep.subr.mxu0 0.0
        %659 = vmatpush1.msra.mxu0 0.0
        %660 = vmatprep.subr.mxu0 0.0
        %661 = vmatpush1.msra.mxu0 0.0
        %662 = vmatprep.subr.mxu0 0.0
        %663 = vmatpush1.msra.mxu0 0.0
        %664 = vmatprep.subr.mxu0 0.0
        %665 = vmatpush1.msra.mxu0 0.0
        %666 = vmatprep.subr.mxu0 0.0
        %667 = vmatpush1.msra.mxu0 0.0
        %668 = vmatprep.subr.mxu0 0.0
        %669 = vmatpush1.msra.mxu0 0.0
        %670 = vmatprep.subr.mxu0 0.0
        %671 = vmatpush1.msra.mxu0 0.0
        %672 = vmatprep.subr.mxu0 0.0
        %673 = vmatpush1.msra.mxu0 0.0
        %674 = vmatprep.subr.mxu0 0.0
        %675 = vmatpush1.msra.mxu0 0.0
        %676 = vmatprep.subr.mxu0 0.0
        %677 = vmatpush1.msra.mxu0 0.0
        %678 = vmatprep.subr.mxu0 0.0
        %679 = vmatpush1.msra.mxu0 0.0
        %680 = vmatprep.subr.mxu0 0.0
        %681 = vmatpush1.msra.mxu0 0.0
        %682 = vmatprep.subr.mxu0 0.0
        %683 = vmatpush1.msra.mxu0 0.0
        %684 = vmatprep.subr.mxu0 0.0
        %685 = vmatpush1.msra.mxu0 0.0
        %686 = vmatprep.subr.mxu0 0.0
        %687 = vmatpush1.msra.mxu0 0.0
        %688 = vmatprep.subr.mxu0 0.0
        %689 = vmatpush1.msra.mxu0 0.0
        %690 = vmatprep.subr.mxu0 0.0
        %691 = vmatpush1.msra.mxu0 0.0
        %692 = vmatprep.subr.mxu0 0.0
        %693 = vmatpush1.msra.mxu0 0.0
        %694 = vmatprep.subr.mxu0 0.0
        %695 = vmatpush1.msra.mxu0 0.0
        %696 = vmatprep.mubr.f32.mxu0 0.0
        %697 = vmatmul.mubr.f32.gmra.mrb[0].mxu0 %v630
        %v698 = vpop.f32.mrb[0].mxu0
        %v699 = vadd.f32 %v627, %v698
        %v700 = vpop.f32.mrb[0].mxu0
        %v701 = vadd.f32 %v627, %v700
        %702 = vdwg.mxu0
        %v705 = vcombine.low %v699, %v701
        %707 = vst [vmem:[%s284] sm:$0xff] %v705
        %s708 = sand.u32 %s181, 1
        %s709 = scalar_lea.sflag [#allocation3], %s708
        %s710 = sand.u32 %s181, 1
        %s711 = smul.addr %s710, 8
        %s712 = scalar_lea.vmem [#allocation2], %s711
        // Predicated region
        $region49: #{net_forward.1} parent=47 // pred_check
          %p713 = pneg %p191
        $region50: #{net_forward.1} parent=47 // pred_check_branch
          %715 = sbr.rel (%p713) target = $region52
        $region51: #{net_forward.1} parent=47 // pred_region
          %s716 = smul.u32 2, %s21
          %s717 = ssub.s32 3, %s716
          %p718 = scmp.lt.s32.totalorder %s717, 2
          %s719 = scalar_select %p718, %s717, 2
          %s720 = smul.u32 64, %s719
          %s722 = ssub.s32 128, %s720
          %723 = vsyncadd %s709, %s722
          %p724 = scmp.ne.s32.totalorder 0, %s720
          %s725 = smul.addr %s716, 64
          %s726 = scalar_lea.hbm %s7, %s725
          %s727 = smul.u32 %s719, 4
          %s728 = sshll.u32 %s727, 4
          %s729 = sshll.u32 %s712, 4
          %s730 = int_to_ptr.vmem [resolvable:$true] %s729
          %732 = dma.vmem_to_hbm [thread:$0]  (%p724), %s730, %s728, %s726, %s709
        $region52: #{net_forward.1} parent=47 // pred_fallthru
          _
      $region48: #{net_forward.1} parent=5 // pred_fallthru
        _
      %p733 = scmp.le.s32.totalorder 2, %s16
      // Predicated region
      $region53: #{net_forward.1} parent=5 // pred_check
        %p734 = pneg %p733
      $region54: #{net_forward.1} parent=5 // pred_check_branch
        %736 = sbr.rel (%p734) target = $region56
      $region55: #{net_forward.1} parent=5 // pred_region
        %s737 = ssub.s32 %s16, 2
        // Predicated region
        $region57: #{net_forward.1} parent=55 // pred_check
          %p738 = pneg %p197
        $region58: #{net_forward.1} parent=55 // pred_check_branch
          %740 = sbr.rel (%p738) target = $region60
        $region59: #{net_forward.1} parent=55 // pred_region
          %s741 = sand.u32 %s182, 1
          %s742 = scalar_lea.sflag [#allocation3], %s741
          %s743 = sand.u32 %s182, 1
          %s744 = smul.addr %s743, 8
          %s745 = scalar_lea.vmem [#allocation2], %s744
          %746 = dma.done %s742, 128
        $region60: #{net_forward.1} parent=55 // pred_fallthru
          _
      $region56: #{net_forward.1} parent=5 // pred_fallthru
        _
    $region6: #{net_forward.1} parent=1 // loop_footer
      %s20 = sadd.s32 1, %s16
    $region7: #{net_forward.1} parent=1 // loop_footer_branch
      %15 = sbr.rel target = $region3
    $region8: #{net_forward.1} parent=1 // loop_exit
      _
    %747 = vsyncpa [#allocation3], 1
    %s748 = scalar_lea.sflag [#allocation3], 1
    %749 = vsyncpa %s748, 1

</llo_original>
